<compile_context>
chip_gen: v7x
topology: tpu7x:2x2x1
jax: 0.10.0
libtpu: 0.0.40
codegen_flags: <defaults>
</compile_context>

<pallas_src>
import functools

import jax
import jax.numpy as jnp
from jax import lax
from jax.experimental import pallas as pl
from jax.experimental.pallas import tpu as pltpu

BN_EPS = 1e-5
_NT = (((1,), (1,)), ((), ()))   # dot_general: contract last dims   (A @ B^T)
_NN = (((1,), (0,)), ((), ()))   # dot_general: standard             (A @ B)
_TN = (((0,), (0,)), ((), ()))   # dot_general: contract first dims  (A^T @ B)


def _round_up(x, m):
    return (x + m - 1) // m * m


# ---------------------------------------------------------------------------
# Kernel 1: self-attention group embedding -> lane-dense new_embeds + x stats
# ---------------------------------------------------------------------------
def _attention_embed_kernel(t_ref, u_ref, wq_ref, wk_ref, wv_ref,
                            x_ref, st_ref, *,
                            inv_temp, cand, tile_b, n_valid, d_pad, e):
    t = t_ref[...]                                   # (Tb, E)   target latents
    u = u_ref[...]                                   # (Tb, C, E) member latents

    # Every candidate's query row is the (repeated) target query, so a single
    # score row per group suffices:
    #   scores[b, c] = (Wq t_b / temp) . (Wk u_bc) = ((Wq t_b / temp) @ Wk) . u_bc
    q = lax.dot_general(t, wq_ref[...], _NT, preferred_element_type=jnp.float32)
    qk = lax.dot_general(q * inv_temp, wk_ref[...], _NN,
                         preferred_element_type=jnp.float32)            # (Tb, E)
    scores = jnp.sum(qk[:, None, :] * u, axis=-1)                        # (Tb, C)
    scores = scores - jnp.max(scores, axis=-1, keepdims=True)
    ex = jnp.exp(scores)
    attn = ex / jnp.sum(ex, axis=-1, keepdims=True)
    # TODO(synk): nn.Dropout(0.2) on attn is stochastic in training mode; treated as identity.

    # sum_C(attn @ V) == C * Wv(sum_c attn[c] * u_c): apply the value projection
    # once to the attention-weighted member sum, then scale by C.
    uw = jnp.sum(attn[:, :, None] * u, axis=1)                           # (Tb, E)
    g = float(cand) * lax.dot_general(uw, wv_ref[...], _NT,
                                      preferred_element_type=jnp.float32)

    rows = pl.program_id(0) * tile_b + lax.broadcasted_iota(jnp.int32, (tile_b, 1), 0)
    mask = (rows < n_valid).astype(jnp.float32)
    g = g * mask
    t = t * mask

    # Fill the lane-padded (Tb, d_pad) output block; the HBM write-back of the
    # whole block is lane-dense regardless of these in-VMEM sub-stores.
    x_ref[:, 0:e] = g * t            # element_embeds
    x_ref[:, e:2 * e] = g            # g_embeds
    x_ref[:, 2 * e:3 * e] = t        # target latent
    if d_pad > 3 * e:
        x_ref[:, 3 * e:] = jnp.zeros((tile_b, d_pad - 3 * e), jnp.float32)

    # Per-tile partial batch statistics of x (zeroed padded rows contribute 0);
    # reduced in the wrapper so the grid axis stays 'parallel'.
    x = x_ref[...]
    st_ref[:, 0, :] = jnp.sum(x, axis=0, keepdims=True)
    st_ref[:, 1, :] = jnp.sum(x * x, axis=0, keepdims=True)


def attention_group_embed(user_latent, target_latent, wq, wk, wv, *,
                          d_pad=None, tile_b=256):
    """user_latent (B,C,E), target_latent (B,E) ->
       x (B_pad, D_pad) with padded rows zeroed, xsum (1, D_pad), xsq (1, D_pad)."""
    b, c, e = user_latent.shape
    d = 3 * e
    if d_pad is None:
        d_pad = _round_up(d, 128)
    tile_b = _round_up(max(8, min(tile_b, _round_up(b, 8))), 8)
    b_pad = _round_up(b, tile_b)
    nb = b_pad // tile_b
    if b_pad != b:
        user_latent = jnp.pad(user_latent, ((0, b_pad - b), (0, 0), (0, 0)))
        target_latent = jnp.pad(target_latent, ((0, b_pad - b), (0, 0)))

    kernel = functools.partial(
        _attention_embed_kernel, inv_temp=1.0 / float(e) ** 0.5, cand=c,
        tile_b=tile_b, n_valid=b, d_pad=d_pad, e=e)

    x, stats = pl.pallas_call(
        kernel,
        out_shape=(jax.ShapeDtypeStruct((b_pad, d_pad), jnp.float32),
                   jax.ShapeDtypeStruct((nb, 2, d_pad), jnp.float32)),
        grid_spec=pltpu.PrefetchScalarGridSpec(
            num_scalar_prefetch=0,
            grid=(nb,),
            in_specs=[
                pl.BlockSpec((tile_b, e), lambda i: (i, 0)),        # target latents
                pl.BlockSpec((tile_b, c, e), lambda i: (i, 0, 0)),  # member latents
                pl.BlockSpec((e, e), lambda i: (0, 0)),             # Wq (out, in)
                pl.BlockSpec((e, e), lambda i: (0, 0)),             # Wk
                pl.BlockSpec((e, e), lambda i: (0, 0)),             # Wv
            ],
            out_specs=[
                pl.BlockSpec((tile_b, d_pad), lambda i: (i, 0)),    # new_embeds (lane dense)
                pl.BlockSpec((1, 2, d_pad), lambda i: (i, 0, 0)),   # per-tile x stats
            ],
        ),
        compiler_params=pltpu.CompilerParams(
            dimension_semantics=("parallel",),
            vmem_limit_bytes=32 * 1024 * 1024,
        ),
    )(target_latent, user_latent, wq, wk, wv)

    xsum = jnp.sum(stats[:, 0, :], axis=0, keepdims=True)   # tiny XLA reductions
    xsq = jnp.sum(stats[:, 1, :], axis=0, keepdims=True)
    return x, xsum, xsq


# ---------------------------------------------------------------------------
# Kernel 2: PredictLayer (training-mode BatchNorm folded into the Linears)
# ---------------------------------------------------------------------------
def _predict_kernel(x_ref, xsum_ref, xsq_ref, g1_ref, be1_ref, w1_ref, b1_ref,
                    g2_ref, be2_ref, w2_ref, b2_ref, o_ref,
                    w1f, b1f, hsum, hsq, w2f, b2f, hcache,
                    *, n_valid, tile_n, cache_hidden, apply_sigmoid):
    p = pl.program_id(0)      # 0: BN1 fold + hidden + h stats, 1: BN2 fold + output
    i = pl.program_id(1)      # batch tile
    inv_n = 1.0 / float(n_valid)

    def hidden_t():
        # h^T = ReLU(W1f @ x^T + b1f) in (H, TILE_N) layout: lane axis = batch tile,
        # so the activation tensor and the final (1, TILE_N) projection are lane-dense.
        hv = lax.dot_general(w1f[...], x_ref[...], _NT,
                             preferred_element_type=jnp.float32)        # (H, T)
        return jnp.maximum(hv + b1f[...], 0.0)

    # -------- pass 0: fold BN1 into (W1, b1); hidden activations + stats ------------
    @pl.when(p == 0)
    def _():
        @pl.when(i == 0)
        def _():
            mean1 = xsum_ref[...] * inv_n                                # (1, D)
            var1 = jnp.maximum(xsq_ref[...] * inv_n - mean1 * mean1, 0.0)
            sc1 = g1_ref[...] * lax.rsqrt(var1 + BN_EPS)                 # (1, D)
            w1f[...] = w1_ref[...] * sc1                                 # (H, D) column scale
            shift1 = be1_ref[...] - mean1 * sc1                          # (1, D)
            b1f[...] = b1_ref[...] + lax.dot_general(
                w1_ref[...], shift1, _NT, preferred_element_type=jnp.float32)   # (H, 1)
            hsum[...] = jnp.zeros_like(hsum)
            hsq[...] = jnp.zeros_like(hsq)
        hv = hidden_t()                                                  # (H, T)
        cols = i * tile_n + lax.broadcasted_iota(jnp.int32, (1, tile_n), 1)
        hv = jnp.where(cols < n_valid, hv, 0.0)                          # exclude padded rows
        if cache_hidden:
            hcache[i] = hv
        hsum[...] += jnp.sum(hv, axis=-1, keepdims=True)                 # (H, 1)
        hsq[...] += jnp.sum(hv * hv, axis=-1, keepdims=True)

    # -------- pass 1: fold BN2 into the output projection; lane-dense store ---------
    @pl.when(p == 1)
    def _():
        @pl.when(i == 0)
        def _():
            mean2 = hsum[...] * inv_n                                    # (H, 1)
            var2 = jnp.maximum(hsq[...] * inv_n - mean2 * mean2, 0.0)
            sc2 = g2_ref[...] * lax.rsqrt(var2 + BN_EPS)                 # (H, 1)
            w2f[...] = w2_ref[...] * sc2
            b2f[...] = b2_ref[...] + jnp.sum(
                (be2_ref[...] - mean2 * sc2) * w2_ref[...], axis=0, keepdims=True)
        hv = hcache[i] if cache_hidden else hidden_t()
        out = lax.dot_general(w2f[...], hv, _TN,
                              preferred_element_type=jnp.float32) + b2f[...]    # (1, T)
        if apply_sigmoid:
            out = jax.nn.sigmoid(out)
        o_ref[:, 0, :] = out


def predict_layer(x, xsum, xsq, params, *, n_valid=None, tile_n=2048,
                  apply_sigmoid=False, hidden_cache_bytes=8 * 1024 * 1024):
    """PredictLayer forward (training-mode BatchNorm).

    x: (N_rows, D_pad) f32 with rows >= n_valid zeroed; xsum/xsq: (1, D_pad)
    batch sum / sum-of-squares over the n_valid real rows.  Returns (n_valid, 1).
    """
    n_rows, d_pad = x.shape
    if n_valid is None:
        n_valid = n_rows
    g1, be1, w1, b1, g2, be2, w2, b2 = params        # PyTorch (out, in) layouts
    h, d = w1.shape

    # Layout plumbing (tiny XLA ops): zero-pad the feature dim to D_pad and present
    # the bias / BN2 / output-projection params in (H, 1) column layout so the whole
    # kernel works on the transposed, lane-dense hidden activations.
    pad_d = d_pad - d
    g1p = jnp.pad(g1, ((0, 0), (0, pad_d)))
    be1p = jnp.pad(be1, ((0, 0), (0, pad_d)))
    w1p = jnp.pad(w1, ((0, 0), (0, pad_d)))
    b1c = b1.reshape(h, 1)
    g2c = g2.reshape(h, 1)
    be2c = be2.reshape(h, 1)
    w2c = w2.reshape(h, 1)
    b2m = b2.reshape(1, 1)

    tile_n = _round_up(max(8, min(tile_n, _round_up(n_rows, 8))), 8)
    n_pad = _round_up(n_rows, tile_n)
    nt = n_pad // tile_n
    if n_pad != n_rows:
        x = jnp.pad(x, ((0, n_pad - n_rows), (0, 0)))

    # Cache the (H, TILE_N) hidden activations across the two passes when they fit
    # VMEM (128 B/row), so x is streamed from HBM exactly once (the x block is parked
    # at block 0 during pass 1); otherwise stream x in both passes and recompute.
    cache_hidden = n_pad * h * 4 <= hidden_cache_bytes
    x_map = (lambda p, i: (i * (1 - p), 0)) if cache_hidden else (lambda p, i: (i, 0))

    kernel = functools.partial(_predict_kernel, n_valid=n_valid, tile_n=tile_n,
                               cache_hidden=cache_hidden, apply_sigmoid=apply_sigmoid)

    def rep(shape):
        return pl.BlockSpec(shape, lambda p, i, _s=shape: tuple(0 for _ in _s))

    out = pl.pallas_call(
        kernel,
        out_shape=jax.ShapeDtypeStruct((nt, 1, tile_n), jnp.float32),
        grid_spec=pltpu.PrefetchScalarGridSpec(
            num_scalar_prefetch=0,
            grid=(2, nt),                                     # (pass, batch tile)
            in_specs=[
                pl.BlockSpec((tile_n, d_pad), x_map),         # x (parked in pass 1 if cached)
                rep((1, d_pad)),      # sum(x)
                rep((1, d_pad)),      # sum(x*x)
                rep((1, d_pad)),      # bn1 gamma
                rep((1, d_pad)),      # bn1 beta
                rep((h, d_pad)),      # W1 (out, in)
                rep((h, 1)),          # b1  (column)
                rep((h, 1)),          # bn2 gamma (column)
                rep((h, 1)),          # bn2 beta  (column)
                rep((h, 1)),          # W2 (column)
                rep((1, 1)),          # b2
            ],
            # Only pass 1 writes; park the output block at 0 during the stats pass so
            # no never-written block is ever written back.
            out_specs=pl.BlockSpec((1, 1, tile_n), lambda p, i: (p * i, 0, 0)),
            scratch_shapes=[
                pltpu.VMEM((h, d_pad), jnp.float32),   # BN1-folded W1
                pltpu.VMEM((h, 1), jnp.float32),       # BN1-folded b1 (column)
                pltpu.VMEM((h, 1), jnp.float32),       # sum(h)   (column)
                pltpu.VMEM((h, 1), jnp.float32),       # sum(h*h) (column)
                pltpu.VMEM((h, 1), jnp.float32),       # BN2-folded W2 (column)
                pltpu.VMEM((1, 1), jnp.float32),       # BN2-folded b2
                pltpu.VMEM((nt if cache_hidden else 1, h, tile_n), jnp.float32),  # hidden cache
            ],
        ),
        compiler_params=pltpu.CompilerParams(
            # TODO(synk): batch-tile axis stays 'arbitrary' (sequential h-stat
            # accumulation), so on v7x this kernel runs on a single TensorCore.
            dimension_semantics=("arbitrary", "arbitrary"),
            vmem_limit_bytes=32 * 1024 * 1024,
        ),
    )(x, xsum, xsq, g1p, be1p, w1p, b1c, g2c, be2c, w2c, b2m)
    return out.reshape(n_pad, 1)[:n_valid]


# ---------------------------------------------------------------------------
# AGREE wrapper + parameters + pure-JAX reference
# ---------------------------------------------------------------------------
def init_agree_params(key, num_users, embedding_dim, hidden=32):
    e = embedding_dim
    d = 3 * e
    ks = jax.random.split(key, 11)
    scale_e = 1.0 / float(e) ** 0.5
    return {
        "embeddings": 0.5 * jax.random.normal(ks[0], (num_users, e), jnp.float32),
        "wq": scale_e * jax.random.normal(ks[1], (e, e), jnp.float32),   # (out, in)
        "wk": scale_e * jax.random.normal(ks[2], (e, e), jnp.float32),
        "wv": scale_e * jax.random.normal(ks[3], (e, e), jnp.float32),
        "predict": (
            1.0 + 0.1 * jax.random.normal(ks[4], (1, d), jnp.float32),    # bn1 gamma
            0.1 * jax.random.normal(ks[5], (1, d), jnp.float32),          # bn1 beta
            jax.random.normal(ks[6], (hidden, d), jnp.float32) / float(d) ** 0.5,   # W1 (out,in)
            0.02 * jax.random.normal(ks[7], (1, hidden), jnp.float32),    # b1
            1.0 + 0.1 * jax.random.normal(ks[8], (1, hidden), jnp.float32),          # bn2 gamma
            0.1 * jax.random.normal(ks[9], (1, hidden), jnp.float32),     # bn2 beta
            jax.random.normal(ks[10], (1, hidden), jnp.float32) / float(hidden) ** 0.5,  # W2 row
            0.03 * jnp.ones((1, 1), jnp.float32),                         # b2
        ),
    }


def agree_forward(params, input_users, group, target_user, *, tile_b=256, tile_n=2048):
    """AGREE.forward (w_group=False). Returns sigmoid scores of shape (B, 1)."""
    del group  # TODO(synk): w_group=True group-embedding add not implemented (module default False).
    emb = params["embeddings"]
    e = emb.shape[1]
    d = 3 * e
    d_pad = _round_up(d, 128)
    # TODO(synk): embedding gathers stay plain XLA gathers outside the Pallas kernels.
    target_latent = jnp.take(emb, target_user[:, 0], axis=0)             # (B, E)
    if input_users.shape[-1] > 1:
        user_latent = jnp.take(emb, input_users, axis=0)                  # (B, C, E)
        x, xsum, xsq = attention_group_embed(
            user_latent, target_latent, params["wq"], params["wk"], params["wv"],
            d_pad=d_pad, tile_b=tile_b)
    else:
        user_latent = jnp.take(emb, input_users[:, 0], axis=0)            # (B, E)
        x = jnp.concatenate(
            [user_latent * target_latent, user_latent, target_latent], axis=1)
        x = jnp.pad(x, ((0, 0), (0, d_pad - d)))
        xsum = jnp.sum(x, axis=0, keepdims=True)
        xsq = jnp.sum(x * x, axis=0, keepdims=True)
    return predict_layer(x, xsum, xsq, params["predict"],
                         n_valid=input_users.shape[0], tile_n=tile_n,
                         apply_sigmoid=True)


def _reference_forward(params, input_users, group, target_user):
    del group
    emb = params["embeddings"]
    tl = jnp.take(emb, target_user[:, 0], axis=0)                          # (B, E)
    if input_users.shape[-1] > 1:
        ul = jnp.take(emb, input_users, axis=0)                            # (B, C, E)
        e = ul.shape[-1]
        qr = jnp.einsum("bce,he->bch",
                        jnp.broadcast_to(tl[:, None, :], ul.shape), params["wq"])
        kr = jnp.einsum("bce,he->bch", ul, params["wk"])
        vr = jnp.einsum("bce,he->bch", ul, params["wv"])
        attn = jax.nn.softmax(
            jnp.einsum("bch,bkh->bck", qr / float(e) ** 0.5, kr), axis=-1)
        g = jnp.sum(jnp.einsum("bck,bkh->bch", attn, vr), axis=1)          # (B, E)
    else:
        g = jnp.take(emb, input_users[:, 0], axis=0)
    x = jnp.concatenate([g * tl, g, tl], axis=1)                           # (B, 3E)

    g1, be1, w1, b1, g2, be2, w2, b2 = params["predict"]
    m1 = x.mean(0, keepdims=True)
    v1 = ((x - m1) ** 2).mean(0, keepdims=True)
    xh = (x - m1) / jnp.sqrt(v1 + BN_EPS) * g1 + be1
    h = jnp.maximum(xh @ w1.T + b1, 0.0)
    m2 = h.mean(0, keepdims=True)
    v2 = ((h - m2) ** 2).mean(0, keepdims=True)
    hh = (h - m2) / jnp.sqrt(v2 + BN_EPS) * g2 + be2
    return jax.nn.sigmoid(hh @ w2.T + b2)


if __name__ == "__main__":
    key = jax.random.PRNGKey(0)
    k_emb, k_users, k_target = jax.random.split(key, 3)

    num_users = 40
    embedding_dim = 32        # -> PredictLayer input dim = 96 (lane-padded to 128), hidden = 32
    batch_groups = 20         # tile_b=8 -> 3 attention tiles; tile_n=16 -> 2 predict tiles
    candidates = 6            # known members per group

    params = init_agree_params(k_emb, num_users, embedding_dim)
    input_users = jax.random.randint(k_users, (batch_groups, candidates), 0, num_users)
    target_user = jax.random.randint(k_target, (batch_groups, 1), 0, num_users)
    group = jnp.zeros((batch_groups, 1), jnp.int32)

    y = agree_forward(params, input_users, group, target_user, tile_b=8, tile_n=16)
    y = jax.block_until_ready(y)

    ref = _reference_forward(params, input_users, group, target_user)
    assert y.shape == (batch_groups, 1)
    assert bool(jnp.all(jnp.isfinite(y)))
    max_err = float(jnp.max(jnp.abs(y - ref)))
    assert jnp.allclose(y, ref, atol=1e-3, rtol=1e-3), f"mismatch vs reference: {max_err}"
    print("KERNEL_OK")
</pallas_src>

<mosaic_0001>
module attributes {stable_mosaic.version = 11 : i64} {
  func.func @_attention_embed_kernel(%arg0: i32, %arg1: memref<8x32xf32, #tpu.memory_space<vmem>>, %arg2: memref<8x6x32xf32, #tpu.memory_space<vmem>>, %arg3: memref<32x32xf32, #tpu.memory_space<vmem>>, %arg4: memref<32x32xf32, #tpu.memory_space<vmem>>, %arg5: memref<32x32xf32, #tpu.memory_space<vmem>>, %arg6: memref<8x128xf32, #tpu.memory_space<vmem>>, %arg7: memref<1x2x128xf32, #tpu.memory_space<vmem>>) attributes {dimension_semantics = [#tpu.dimension_semantics<parallel>], iteration_bounds = array<i64: 3>, scalar_prefetch = 0 : i64, scratch_operands = 0 : i64, tpu.core_type = #tpu.core_type<tc>, window_params = [{transform_indices = @transform_0, window_bounds = array<i64: 8, 32>}, {transform_indices = @transform_1, window_bounds = array<i64: 8, 6, 32>}, {pipeline_mode = #tpu.pipeline_mode<synchronous>, transform_indices = @transform_2, window_bounds = array<i64: 32, 32>}, {pipeline_mode = #tpu.pipeline_mode<synchronous>, transform_indices = @transform_3, window_bounds = array<i64: 32, 32>}, {pipeline_mode = #tpu.pipeline_mode<synchronous>, transform_indices = @transform_4, window_bounds = array<i64: 32, 32>}, {transform_indices = @transform_5, window_bounds = array<i64: 8, 128>}, {transform_indices = @transform_6, window_bounds = array<i64: 1, 2, 128>}]} {
    %c0 = arith.constant 0 : index
    %c0_0 = arith.constant 0 : index
    %0 = vector.load %arg1[%c0, %c0_0] : memref<8x32xf32, #tpu.memory_space<vmem>>, vector<8x32xf32>
    %c0_1 = arith.constant 0 : index
    %c0_2 = arith.constant 0 : index
    %c0_3 = arith.constant 0 : index
    %1 = vector.load %arg2[%c0_1, %c0_2, %c0_3] : memref<8x6x32xf32, #tpu.memory_space<vmem>>, vector<8x6x32xf32>
    %c0_4 = arith.constant 0 : index
    %c0_5 = arith.constant 0 : index
    %2 = vector.load %arg3[%c0_4, %c0_5] : memref<32x32xf32, #tpu.memory_space<vmem>>, vector<32x32xf32>
    %cst = arith.constant dense<0.000000e+00> : vector<8x32xf32>
    %3 = tpu.matmul %0, %2, %cst {dimension_numbers = #tpu.dot_dimension_numbers<[1], [1], [0], [0], [0, 0, 1, 0], [], []>} : vector<8x32xf32>, vector<32x32xf32>, vector<8x32xf32> -> vector<8x32xf32>
    %cst_6 = arith.constant 0.176776692 : f32
    %4 = vector.broadcast %cst_6 : f32 to vector<8x32xf32>
    %5 = arith.mulf %3, %4 : vector<8x32xf32>
    %c0_7 = arith.constant 0 : index
    %c0_8 = arith.constant 0 : index
    %6 = vector.load %arg4[%c0_7, %c0_8] : memref<32x32xf32, #tpu.memory_space<vmem>>, vector<32x32xf32>
    %cst_9 = arith.constant dense<0.000000e+00> : vector<8x32xf32>
    %7 = tpu.matmul %5, %6, %cst_9 {dimension_numbers = #tpu.dot_dimension_numbers<[1], [0], [0], [1], [0, 0, 1, 1], [], []>} : vector<8x32xf32>, vector<32x32xf32>, vector<8x32xf32> -> vector<8x32xf32>
    %8 = vector.shape_cast %7 : vector<8x32xf32> to vector<8x1x32xf32>
    %9 = vector.broadcast %8 : vector<8x1x32xf32> to vector<8x6x32xf32>
    %10 = arith.mulf %9, %1 : vector<8x6x32xf32>
    %cst_10 = arith.constant dense<0.000000e+00> : vector<8x6xf32>
    %11 = vector.multi_reduction <add>, %10, %cst_10 [2] : vector<8x6x32xf32> to vector<8x6xf32>
    %cst_11 = arith.constant dense<0xFF800000> : vector<8xf32>
    %12 = vector.multi_reduction <maximumf>, %11, %cst_11 [1] : vector<8x6xf32> to vector<8xf32>
    %13 = vector.shape_cast %12 : vector<8xf32> to vector<8x1xf32>
    %14 = vector.broadcast %13 : vector<8x1xf32> to vector<8x6xf32>
    %15 = arith.subf %11, %14 : vector<8x6xf32>
    %16 = math.exp %15 : vector<8x6xf32>
    %cst_12 = arith.constant dense<0.000000e+00> : vector<8xf32>
    %17 = vector.multi_reduction <add>, %16, %cst_12 [1] : vector<8x6xf32> to vector<8xf32>
    %18 = vector.shape_cast %17 : vector<8xf32> to vector<8x1xf32>
    %19 = vector.broadcast %18 : vector<8x1xf32> to vector<8x6xf32>
    %20 = arith.divf %16, %19 : vector<8x6xf32>
    %21 = vector.shape_cast %20 : vector<8x6xf32> to vector<8x6x1xf32>
    %22 = vector.broadcast %21 : vector<8x6x1xf32> to vector<8x6x32xf32>
    %23 = arith.mulf %22, %1 : vector<8x6x32xf32>
    %cst_13 = arith.constant dense<0.000000e+00> : vector<8x32xf32>
    %24 = vector.multi_reduction <add>, %23, %cst_13 [1] : vector<8x6x32xf32> to vector<8x32xf32>
    %c0_14 = arith.constant 0 : index
    %c0_15 = arith.constant 0 : index
    %25 = vector.load %arg5[%c0_14, %c0_15] : memref<32x32xf32, #tpu.memory_space<vmem>>, vector<32x32xf32>
    %cst_16 = arith.constant dense<0.000000e+00> : vector<8x32xf32>
    %26 = tpu.matmul %24, %25, %cst_16 {dimension_numbers = #tpu.dot_dimension_numbers<[1], [1], [0], [0], [0, 0, 1, 0], [], []>} : vector<8x32xf32>, vector<32x32xf32>, vector<8x32xf32> -> vector<8x32xf32>
    %cst_17 = arith.constant 6.000000e+00 : f32
    %27 = vector.broadcast %cst_17 : f32 to vector<8x32xf32>
    %28 = arith.mulf %27, %26 : vector<8x32xf32>
    %c8_i32 = arith.constant 8 : i32
    %29 = arith.muli %arg0, %c8_i32 : i32
    %30 = tpu.iota {dimensions = array<i32: 0>} : vector<8x1xi32>
    %31 = vector.broadcast %29 : i32 to vector<8x1xi32>
    %32 = arith.addi %31, %30 : vector<8x1xi32>
    %c20_i32 = arith.constant 20 : i32
    %33 = vector.broadcast %c20_i32 : i32 to vector<8x1xi32>
    %34 = arith.cmpi slt, %32, %33 : vector<8x1xi32>
    %35 = arith.extui %34 : vector<8x1xi1> to vector<8x1xi32>
    %36 = arith.sitofp %35 : vector<8x1xi32> to vector<8x1xf32>
    %37 = vector.broadcast %36 : vector<8x1xf32> to vector<8x32xf32>
    %38 = arith.mulf %28, %37 : vector<8x32xf32>
    %39 = vector.broadcast %36 : vector<8x1xf32> to vector<8x32xf32>
    %40 = arith.mulf %0, %39 : vector<8x32xf32>
    %41 = arith.mulf %38, %40 : vector<8x32xf32>
    %c0_18 = arith.constant 0 : index
    %c0_19 = arith.constant 0 : index
    %42 = vector.load %arg6[%c0_18, %c0_19] : memref<8x128xf32, #tpu.memory_space<vmem>>, vector<8x32xf32>
    tpu.vector_store %arg6[%c0_18, %c0_19], %41 {strides = array<i32>} : memref<8x128xf32, #tpu.memory_space<vmem>>, vector<8x32xf32>,
    %c0_20 = arith.constant 0 : index
    %c32 = arith.constant 32 : index
    %43 = vector.load %arg6[%c0_20, %c32] : memref<8x128xf32, #tpu.memory_space<vmem>>, vector<8x32xf32>
    tpu.vector_store %arg6[%c0_20, %c32], %38 {strides = array<i32>} : memref<8x128xf32, #tpu.memory_space<vmem>>, vector<8x32xf32>,
    %c0_21 = arith.constant 0 : index
    %c64 = arith.constant 64 : index
    %44 = vector.load %arg6[%c0_21, %c64] : memref<8x128xf32, #tpu.memory_space<vmem>>, vector<8x32xf32>
    tpu.vector_store %arg6[%c0_21, %c64], %40 {strides = array<i32>} : memref<8x128xf32, #tpu.memory_space<vmem>>, vector<8x32xf32>,
    %cst_22 = arith.constant 0.000000e+00 : f32
    %45 = vector.broadcast %cst_22 : f32 to vector<8x32xf32>
    %c0_23 = arith.constant 0 : index
    %c96 = arith.constant 96 : index
    %46 = vector.load %arg6[%c0_23, %c96] : memref<8x128xf32, #tpu.memory_space<vmem>>, vector<8x32xf32>
    tpu.vector_store %arg6[%c0_23, %c96], %45 {strides = array<i32>} : memref<8x128xf32, #tpu.memory_space<vmem>>, vector<8x32xf32>,
    %c0_24 = arith.constant 0 : index
    %c0_25 = arith.constant 0 : index
    %47 = vector.load %arg6[%c0_24, %c0_25] : memref<8x128xf32, #tpu.memory_space<vmem>>, vector<8x128xf32>
    %cst_26 = arith.constant dense<0.000000e+00> : vector<128xf32>
    %48 = vector.multi_reduction <add>, %47, %cst_26 [0] : vector<8x128xf32> to vector<128xf32>
    %49 = vector.shape_cast %48 : vector<128xf32> to vector<1x128xf32>
    %c0_27 = arith.constant 0 : index
    %c0_28 = arith.constant 0 : index
    %c0_29 = arith.constant 0 : index
    %50 = vector.load %arg7[%c0_27, %c0_28, %c0_29] : memref<1x2x128xf32, #tpu.memory_space<vmem>>, vector<1x1x128xf32>
    %51 = vector.shape_cast %50 : vector<1x1x128xf32> to vector<1x128xf32>
    %52 = vector.shape_cast %49 : vector<1x128xf32> to vector<1x1x128xf32>
    tpu.vector_store %arg7[%c0_27, %c0_28, %c0_29], %52 {strides = array<i32>} : memref<1x2x128xf32, #tpu.memory_space<vmem>>, vector<1x1x128xf32>,
    %53 = arith.mulf %47, %47 : vector<8x128xf32>
    %cst_30 = arith.constant dense<0.000000e+00> : vector<128xf32>
    %54 = vector.multi_reduction <add>, %53, %cst_30 [0] : vector<8x128xf32> to vector<128xf32>
    %55 = vector.shape_cast %54 : vector<128xf32> to vector<1x128xf32>
    %c0_31 = arith.constant 0 : index
    %c1 = arith.constant 1 : index
    %c0_32 = arith.constant 0 : index
    %56 = vector.load %arg7[%c0_31, %c1, %c0_32] : memref<1x2x128xf32, #tpu.memory_space<vmem>>, vector<1x1x128xf32>
    %57 = vector.shape_cast %56 : vector<1x1x128xf32> to vector<1x128xf32>
    %58 = vector.shape_cast %55 : vector<1x128xf32> to vector<1x1x128xf32>
    tpu.vector_store %arg7[%c0_31, %c1, %c0_32], %58 {strides = array<i32>} : memref<1x2x128xf32, #tpu.memory_space<vmem>>, vector<1x1x128xf32>,
    return
  }
  func.func @transform_0(%arg0: i32) -> (i32, i32) {
    %c0_i32 = arith.constant 0 : i32
    %c0_i32_0 = arith.constant 0 : i32
    return %arg0, %c0_i32 : i32, i32
  }
  func.func @transform_1(%arg0: i32) -> (i32, i32, i32) {
    %c0_i32 = arith.constant 0 : i32
    %c0_i32_0 = arith.constant 0 : i32
    %c0_i32_1 = arith.constant 0 : i32
    return %arg0, %c0_i32, %c0_i32_0 : i32, i32, i32
  }
  func.func @transform_2(%arg0: i32) -> (i32, i32) {
    %c0_i32 = arith.constant 0 : i32
    %c0_i32_0 = arith.constant 0 : i32
    %c0_i32_1 = arith.constant 0 : i32
    return %c0_i32, %c0_i32_0 : i32, i32
  }
  func.func @transform_3(%arg0: i32) -> (i32, i32) {
    %c0_i32 = arith.constant 0 : i32
    %c0_i32_0 = arith.constant 0 : i32
    %c0_i32_1 = arith.constant 0 : i32
    return %c0_i32, %c0_i32_0 : i32, i32
  }
  func.func @transform_4(%arg0: i32) -> (i32, i32) {
    %c0_i32 = arith.constant 0 : i32
    %c0_i32_0 = arith.constant 0 : i32
    %c0_i32_1 = arith.constant 0 : i32
    return %c0_i32, %c0_i32_0 : i32, i32
  }
  func.func @transform_5(%arg0: i32) -> (i32, i32) {
    %c0_i32 = arith.constant 0 : i32
    %c0_i32_0 = arith.constant 0 : i32
    return %arg0, %c0_i32 : i32, i32
  }
  func.func @transform_6(%arg0: i32) -> (i32, i32, i32) {
    %c0_i32 = arith.constant 0 : i32
    %c0_i32_0 = arith.constant 0 : i32
    %c0_i32_1 = arith.constant 0 : i32
    return %arg0, %c0_i32, %c0_i32_0 : i32, i32, i32
  }
}

</mosaic_0001>

<llo_original>
// kernel: tpu_custom_call.1
$region0: #{tpu_custom_call.1}
  #allocation0 [shape = 'u32[]', space=smem, size = 0x4, offset = 0x4, fixed_abs, tag = 'smem constant byte address 0x4 - core index']
  #allocation1 [shape = 'u32[144,128]{1,0:T(1,128)}', space=vmem, size = 0x12000, scoped, tag = 'internal scratch']
  %s0 = inlined_call_operand.vmem [shape: f32[24,32], index: 0, kind: input, shape index: {}]
  %s1 = inlined_call_operand.vmem [shape: f32[24,6,32], index: 1, kind: input, shape index: {}]
  %s2 = inlined_call_operand.vmem [shape: f32[32,32], index: 2, kind: input, shape index: {}]
  %s3 = inlined_call_operand.vmem [shape: f32[32,32], index: 3, kind: input, shape index: {}]
  %s4 = inlined_call_operand.vmem [shape: f32[32,32], index: 4, kind: input, shape index: {}]
  %s5 = inlined_call_operand.hbm [shape: f32[24,128], index: 5, kind: output, shape index: {0}]
  %s6 = inlined_call_operand.hbm [shape: f32[3,2,128], index: 6, kind: output, shape index: {1}]
  %7 = xla_tuple %s5, %s6
  %s8 = sld [smem:[#allocation0]]
  $region61: #{tpu_custom_call.1} parent=0
    _
  %s10 = ssub.s32 1, %s8
  %s11 = scalar_select 0, %s10, %s8
  $region1: #{tpu_custom_call.1} parent=0
    #allocation2 [shape = 'u8[8192]{0}', space=vmem, size = 0x2000, scoped, tag = 'output window, operand 0']
    #allocation3 [shape = 's32[2]{0}', space=sflag, size = 0x8, scoped, tag = 'scoped memory for tpu_custom_call.1']
    #allocation4 [shape = 'u8[2048]{0}', space=vmem, size = 0x800, scoped, tag = 'output window, operand 1']
    #allocation5 [shape = 's32[2]{0}', space=sflag, size = 0x8, scoped, tag = 'scoped memory for tpu_custom_call.1']
    %12 = vsyncpa [#allocation3], 0
    %s13 = scalar_lea.sflag [#allocation3], 1
    %14 = vsyncpa %s13, 0
    %15 = vsyncpa [#allocation5], 0
    %s16 = scalar_lea.sflag [#allocation5], 1
    %17 = vsyncpa %s16, 0
    loop: start=0, step=1, limit=5
    $region2: #{tpu_custom_call.1} parent=1 // loop_pre_header
      _
    $region3: #{tpu_custom_call.1} parent=1 // loop_header
      %s19 = sphi 0, %s23
      %p20 = scmp.ge.s32.totalorder %s19, 5
      %s29 = sphi 0, %s31
      %s32 = sphi 0, %s29
      %s33 = sphi 0, %s32
      %s49 = sphi 0, %s33
      %s55 = sphi 0, %s57
      %s58 = sphi 0, %s55
      %s59 = sphi 0, %s58
      %s75 = sphi 0, %s59
      %s79 = sphi 0, %s79
      %s81 = sphi 0, %s79
      %s82 = sphi 0, %s81
      %s96 = sphi 0, %s82
      %s100 = sphi 0, %s100
      %s102 = sphi 0, %s100
      %s103 = sphi 0, %s102
      %s117 = sphi 0, %s103
      %s121 = sphi 0, %s121
      %s123 = sphi 0, %s121
      %s124 = sphi 0, %s123
      %s138 = sphi 0, %s124
      %s144 = sphi 0, %s146
      %s147 = sphi 0, %s144
      %s148 = sphi 0, %s147
      %s164 = sphi 0, %s148
      %s170 = sphi 0, %s172
      %s173 = sphi 0, %s170
      %s174 = sphi 0, %s173
      %s190 = sphi 0, %s174
    $region4: #{tpu_custom_call.1} parent=1 // loop_header_branch
      %22 = sbr.rel (%p20) target = $region8
    $region5: #{tpu_custom_call.1} parent=1 // loop_body
      %s24 = ssub.s32 %s19, 1
      %s25 = ssub.s32 %s19, 2
      %s26 = sadd.s32 %s19, 1
      %s27 = ssub.s32 %s19, %s26
      %p28 = scmp.eq.s32.totalorder %s27, 0
      %s30 = sadd.s32 %s29, 1
      %s31 = scalar_select %p28, %s29, %s30
      %p34 = pneg %p28
      %p35 = scmp.eq.s32.totalorder %s19, 2
      %p36 = por %p34, %p35
      %p37 = scmp.ne.s32.totalorder %s29, %s32
      %p38 = scmp.eq.s32.totalorder %s19, 0
      %p39 = por %p37, %p38
      %p40 = scmp.ne.s32.totalorder %s29, %s32
      %p41 = scmp.eq.s32.totalorder %s24, 2
      %p42 = por %p40, %p41
      %p43 = scmp.ne.s32.totalorder %s32, %s33
      %p44 = scmp.eq.s32.totalorder %s24, 0
      %p45 = por %p43, %p44
      %p46 = scmp.ne.s32.totalorder %s32, %s33
      %p47 = scmp.eq.s32.totalorder %s25, 2
      %p48 = por %p46, %p47
      %p50 = scmp.ne.s32.totalorder %s33, %s49
      %p51 = scmp.eq.s32.totalorder %s25, 0
      %p52 = por %p50, %p51
      %s53 = ssub.s32 %s19, %s26
      %p54 = scmp.eq.s32.totalorder %s53, 0
      %s56 = sadd.s32 %s55, 1
      %s57 = scalar_select %p54, %s55, %s56
      %p60 = pneg %p54
      %p61 = scmp.eq.s32.totalorder %s19, 2
      %p62 = por %p60, %p61
      %p63 = scmp.ne.s32.totalorder %s55, %s58
      %p64 = scmp.eq.s32.totalorder %s19, 0
      %p65 = por %p63, %p64
      %p66 = scmp.ne.s32.totalorder %s55, %s58
      %p67 = scmp.eq.s32.totalorder %s24, 2
      %p68 = por %p66, %p67
      %p69 = scmp.ne.s32.totalorder %s58, %s59
      %p70 = scmp.eq.s32.totalorder %s24, 0
      %p71 = por %p69, %p70
      %p72 = scmp.ne.s32.totalorder %s58, %s59
      %p73 = scmp.eq.s32.totalorder %s25, 2
      %p74 = por %p72, %p73
      %p76 = scmp.ne.s32.totalorder %s59, %s75
      %p77 = scmp.eq.s32.totalorder %s25, 0
      %p78 = por %p76, %p77
      %s80 = sadd.s32 %s79, 1
      %p83 = scmp.eq.s32.totalorder %s19, 2
      %p84 = scmp.ne.s32.totalorder %s79, %s81
      %p85 = scmp.eq.s32.totalorder %s19, 0
      %p86 = por %p84, %p85
      %p87 = scmp.ne.s32.totalorder %s79, %s81
      %p88 = scmp.eq.s32.totalorder %s24, 2
      %p89 = por %p87, %p88
      %p90 = scmp.ne.s32.totalorder %s81, %s82
      %p91 = scmp.eq.s32.totalorder %s24, 0
      %p92 = por %p90, %p91
      %p93 = scmp.ne.s32.totalorder %s81, %s82
      %p94 = scmp.eq.s32.totalorder %s25, 2
      %p95 = por %p93, %p94
      %p97 = scmp.ne.s32.totalorder %s82, %s96
      %p98 = scmp.eq.s32.totalorder %s25, 0
      %p99 = por %p97, %p98
      %s101 = sadd.s32 %s100, 1
      %p104 = scmp.eq.s32.totalorder %s19, 2
      %p105 = scmp.ne.s32.totalorder %s100, %s102
      %p106 = scmp.eq.s32.totalorder %s19, 0
      %p107 = por %p105, %p106
      %p108 = scmp.ne.s32.totalorder %s100, %s102
      %p109 = scmp.eq.s32.totalorder %s24, 2
      %p110 = por %p108, %p109
      %p111 = scmp.ne.s32.totalorder %s102, %s103
      %p112 = scmp.eq.s32.totalorder %s24, 0
      %p113 = por %p111, %p112
      %p114 = scmp.ne.s32.totalorder %s102, %s103
      %p115 = scmp.eq.s32.totalorder %s25, 2
      %p116 = por %p114, %p115
      %p118 = scmp.ne.s32.totalorder %s103, %s117
      %p119 = scmp.eq.s32.totalorder %s25, 0
      %p120 = por %p118, %p119
      %s122 = sadd.s32 %s121, 1
      %p125 = scmp.eq.s32.totalorder %s19, 2
      %p126 = scmp.ne.s32.totalorder %s121, %s123
      %p127 = scmp.eq.s32.totalorder %s19, 0
      %p128 = por %p126, %p127
      %p129 = scmp.ne.s32.totalorder %s121, %s123
      %p130 = scmp.eq.s32.totalorder %s24, 2
      %p131 = por %p129, %p130
      %p132 = scmp.ne.s32.totalorder %s123, %s124
      %p133 = scmp.eq.s32.totalorder %s24, 0
      %p134 = por %p132, %p133
      %p135 = scmp.ne.s32.totalorder %s123, %s124
      %p136 = scmp.eq.s32.totalorder %s25, 2
      %p137 = por %p135, %p136
      %p139 = scmp.ne.s32.totalorder %s124, %s138
      %p140 = scmp.eq.s32.totalorder %s25, 0
      %p141 = por %p139, %p140
      %s142 = ssub.s32 %s19, %s26
      %p143 = scmp.eq.s32.totalorder %s142, 0
      %s145 = sadd.s32 %s144, 1
      %s146 = scalar_select %p143, %s144, %s145
      %p149 = pneg %p143
      %p150 = scmp.eq.s32.totalorder %s19, 2
      %p151 = por %p149, %p150
      %p152 = scmp.ne.s32.totalorder %s144, %s147
      %p153 = scmp.eq.s32.totalorder %s19, 0
      %p154 = por %p152, %p153
      %p155 = scmp.ne.s32.totalorder %s144, %s147
      %p156 = scmp.eq.s32.totalorder %s24, 2
      %p157 = por %p155, %p156
      %p158 = scmp.ne.s32.totalorder %s147, %s148
      %p159 = scmp.eq.s32.totalorder %s24, 0
      %p160 = por %p158, %p159
      %p161 = scmp.ne.s32.totalorder %s147, %s148
      %p162 = scmp.eq.s32.totalorder %s25, 2
      %p163 = por %p161, %p162
      %p165 = scmp.ne.s32.totalorder %s148, %s164
      %p166 = scmp.eq.s32.totalorder %s25, 0
      %p167 = por %p165, %p166
      %s168 = ssub.s32 %s19, %s26
      %p169 = scmp.eq.s32.totalorder %s168, 0
      %s171 = sadd.s32 %s170, 1
      %s172 = scalar_select %p169, %s170, %s171
      %p175 = pneg %p169
      %p176 = scmp.eq.s32.totalorder %s19, 2
      %p177 = por %p175, %p176
      %p178 = scmp.ne.s32.totalorder %s170, %s173
      %p179 = scmp.eq.s32.totalorder %s19, 0
      %p180 = por %p178, %p179
      %p181 = scmp.ne.s32.totalorder %s170, %s173
      %p182 = scmp.eq.s32.totalorder %s24, 2
      %p183 = por %p181, %p182
      %p184 = scmp.ne.s32.totalorder %s173, %s174
      %p185 = scmp.eq.s32.totalorder %s24, 0
      %p186 = por %p184, %p185
      %p187 = scmp.ne.s32.totalorder %s173, %s174
      %p188 = scmp.eq.s32.totalorder %s25, 2
      %p189 = por %p187, %p188
      %p191 = scmp.ne.s32.totalorder %s174, %s190
      %p192 = scmp.eq.s32.totalorder %s25, 0
      %p193 = por %p191, %p192
      %p194 = scmp.le.s32.totalorder 1, %s19
      %p195 = scmp.lt.s32.totalorder %s19, 4
      %p196 = pnand %p194, %p195
      %p197 = pneg %p196
      // Predicated region
      $region9: #{tpu_custom_call.1} parent=5 // pred_check
        _
      $region10: #{tpu_custom_call.1} parent=5 // pred_check_branch
        %199 = sbr.rel (%p196) target = $region12
      $region11: #{tpu_custom_call.1} parent=5 // pred_region
        %s200 = ssub.s32 %s19, 1
        // Predicated region
        $region13: #{tpu_custom_call.1} parent=11 // pred_check
          %p201 = pneg %p92
        $region14: #{tpu_custom_call.1} parent=11 // pred_check_branch
          %203 = sbr.rel (%p201) target = $region16
        $region15: #{tpu_custom_call.1} parent=11 // pred_region
          _
        $region16: #{tpu_custom_call.1} parent=11 // pred_fallthru
          _
        // Predicated region
        $region17: #{tpu_custom_call.1} parent=11 // pred_check
          %p204 = pneg %p113
        $region18: #{tpu_custom_call.1} parent=11 // pred_check_branch
          %206 = sbr.rel (%p204) target = $region20
        $region19: #{tpu_custom_call.1} parent=11 // pred_region
          _
        $region20: #{tpu_custom_call.1} parent=11 // pred_fallthru
          _
        // Predicated region
        $region21: #{tpu_custom_call.1} parent=11 // pred_check
          %p207 = pneg %p134
        $region22: #{tpu_custom_call.1} parent=11 // pred_check_branch
          %209 = sbr.rel (%p207) target = $region24
        $region23: #{tpu_custom_call.1} parent=11 // pred_region
          _
        $region24: #{tpu_custom_call.1} parent=11 // pred_fallthru
          _
      $region12: #{tpu_custom_call.1} parent=5 // pred_fallthru
        _
      %p210 = scmp.lt.s32.totalorder %s19, 3
      // Predicated region
      $region25: #{tpu_custom_call.1} parent=5 // pred_check
        %p211 = pneg %p210
      $region26: #{tpu_custom_call.1} parent=5 // pred_check_branch
        %213 = sbr.rel (%p211) target = $region28
      $region27: #{tpu_custom_call.1} parent=5 // pred_region
        // Predicated region
        $region29: #{tpu_custom_call.1} parent=27 // pred_check
          %p214 = pneg %p39
        $region30: #{tpu_custom_call.1} parent=27 // pred_check_branch
          %216 = sbr.rel (%p214) target = $region32
        $region31: #{tpu_custom_call.1} parent=27 // pred_region
          %p217 = scmp.lt.s32.totalorder %s19, 2
          %s218 = scalar_select %p217, %s19, 2
          %s219 = smul.addr %s218, 8
          %s220 = scalar_lea.vmem %s0, %s219
        $region32: #{tpu_custom_call.1} parent=27 // pred_fallthru
          _
        // Predicated region
        $region33: #{tpu_custom_call.1} parent=27 // pred_check
          %p221 = pneg %p65
        $region34: #{tpu_custom_call.1} parent=27 // pred_check_branch
          %223 = sbr.rel (%p221) target = $region36
        $region35: #{tpu_custom_call.1} parent=27 // pred_region
          %s224 = smul.u32 8, %s19
          %p225 = scmp.lt.s32.totalorder %s224, 23
          %s226 = scalar_select %p225, %s224, 23
          %s227 = smul.addr %s226, 8
          %s228 = scalar_lea.vmem %s1, %s227
          %s229 = smul.u32 8, %s19
        $region36: #{tpu_custom_call.1} parent=27 // pred_fallthru
          _
      $region28: #{tpu_custom_call.1} parent=5 // pred_fallthru
        _
      %p230 = scmp.le.s32.totalorder 1, %s19
      %p231 = scmp.lt.s32.totalorder %s19, 4
      %p232 = pnand %p230, %p231
      %p233 = pneg %p232
      // Predicated region
      $region37: #{tpu_custom_call.1} parent=5 // pred_check
        _
      $region38: #{tpu_custom_call.1} parent=5 // pred_check_branch
        %235 = sbr.rel (%p232) target = $region40
      $region39: #{tpu_custom_call.1} parent=5 // pred_region
        %s236 = ssub.s32 %s19, 1
        %p237 = scmp.lt.s32.totalorder %s24, 2
        %s238 = scalar_select %p237, %s24, 2
        %s239 = smul.addr %s238, 8
        %s240 = scalar_lea.vmem %s0, %s239
        %p241 = pneg %p45
        %p242 = pneg %p42
        %s243 = smul.u32 8, %s24
        %p244 = scmp.lt.s32.totalorder %s243, 23
        %s245 = scalar_select %p244, %s243, 23
        %s246 = smul.addr %s245, 8
        %s247 = scalar_lea.vmem %s1, %s246
        %p248 = pneg %p71
        %p249 = pneg %p68
        %p250 = pneg %p92
        %p251 = pneg %p89
        %p252 = pneg %p113
        %p253 = pneg %p110
        %p254 = pneg %p134
        %p255 = pneg %p131
        %p256 = pneg %p160
        %p257 = pneg %p157
        %s258 = sand.u32 %s147, 1
        %s259 = scalar_lea.sflag [#allocation3], %s258
        %s260 = sand.u32 %s147, 1
        %s261 = smul.addr %s260, 8
        %s262 = scalar_lea.vmem [#allocation2], %s261
        %p263 = pneg %p186
        %p264 = pneg %p183
        %s265 = sand.u32 %s173, 1
        %s266 = scalar_lea.sflag [#allocation5], %s265
        %s267 = sand.u32 %s173, 1
        %s268 = smul.addr %s267, 2
        %s269 = scalar_lea.vmem [#allocation4], %s268
        %p270 = scmp.lt.s32.totalorder %s24, 2
        %s271 = scalar_select %p270, %s24, 2
        %s272 = smul.addr %s271, 8
        %s273 = scalar_lea.vmem %s0, %s272
        %s274 = smul.u32 8, %s24
        %p275 = scmp.lt.s32.totalorder %s274, 23
        %s276 = scalar_select %p275, %s274, 23
        %s277 = smul.addr %s276, 8
        %s278 = scalar_lea.vmem %s1, %s277
        %s279 = smul.u32 8, %s24
        %v280 = vld [vmem:[%s273] sm:$0xff]
        %v281 = vld [vmem:[%s278] sm:$0x3f]
        %v282 = vld [vmem:[%s278 + $0x8] sm:$0x3f]
        %v283 = vld [vmem:[%s278 + $0x10] sm:$0x3f]
        %v284 = vld [vmem:[%s278 + $0x18] sm:$0x3f]
        %v285 = vld [vmem:[%s278 + $0x20] sm:$0x3f]
        %v286 = vld [vmem:[%s278 + $0x28] sm:$0x3f]
        %v287 = vld [vmem:[%s278 + $0x30] sm:$0x3f]
        %v288 = vld [vmem:[%s278 + $0x38] sm:$0x3f]
        %v289 = vld [vmem:[%s2] sm:$0xff]
        %v290 = vld [vmem:[%s2 + $0x8] sm:$0xff]
        %v291 = vld [vmem:[%s2 + $0x10] sm:$0xff]
        %v292 = vld [vmem:[%s2 + $0x18] sm:$0xff]
        %vm293 = vcmask 261120
        %v295 = vsel %vm293, %v280, 0
        %v298 = vsel %vm293, %v289, 0
        %v301 = vsel %vm293, %v290, 0
        %v304 = vsel %vm293, %v291, 0
        %v307 = vsel %vm293, %v292, 0
        %309 = vmatprep.subr.mxu0 0.0
        %310 = vmatpush1.xpose.msra.mxu0 %v298
        %311 = vmatprep.subr.mxu0 0.0
        %312 = vmatpush1.xpose.msra.mxu0 %v301
        %313 = vmatprep.subr.mxu0 0.0
        %314 = vmatpush1.xpose.msra.mxu0 %v304
        %315 = vmatprep.subr.mxu0 0.0
        %316 = vmatpush1.xpose.msra.mxu0 %v307
        %317 = vmatprep.subr.mxu0 0.0
        %318 = vmatpush1.xpose.msra.mxu0 0.0
        %319 = vmatprep.subr.mxu0 0.0
        %320 = vmatpush1.xpose.msra.mxu0 0.0
        %321 = vmatprep.subr.mxu0 0.0
        %322 = vmatpush1.xpose.msra.mxu0 0.0
        %323 = vmatprep.subr.mxu0 0.0
        %324 = vmatpush1.xpose.msra.mxu0 0.0
        %325 = vmatprep.subr.mxu0 0.0
        %326 = vmatpush1.xpose.msra.mxu0 0.0
        %327 = vmatprep.subr.mxu0 0.0
        %328 = vmatpush1.xpose.msra.mxu0 0.0
        %329 = vmatprep.subr.mxu0 0.0
        %330 = vmatpush1.xpose.msra.mxu0 0.0
        %331 = vmatprep.subr.mxu0 0.0
        %332 = vmatpush1.xpose.msra.mxu0 0.0
        %333 = vmatprep.subr.mxu0 0.0
        %334 = vmatpush1.xpose.msra.mxu0 0.0
        %335 = vmatprep.subr.mxu0 0.0
        %336 = vmatpush1.xpose.msra.mxu0 0.0
        %337 = vmatprep.subr.mxu0 0.0
        %338 = vmatpush1.xpose.msra.mxu0 0.0
        %339 = vmatprep.subr.mxu0 0.0
        %340 = vmatpush1.xpose.msra.mxu0 0.0
        %341 = vmatprep.subr.mxu0 0.0
        %342 = vmatpush1.xpose.msra.mxu0 0.0
        %343 = vmatprep.subr.mxu0 0.0
        %344 = vmatpush1.xpose.msra.mxu0 0.0
        %345 = vmatprep.subr.mxu0 0.0
        %346 = vmatpush1.xpose.msra.mxu0 0.0
        %347 = vmatprep.subr.mxu0 0.0
        %348 = vmatpush1.xpose.msra.mxu0 0.0
        %349 = vmatprep.subr.mxu0 0.0
        %350 = vmatpush1.xpose.msra.mxu0 0.0
        %351 = vmatprep.subr.mxu0 0.0
        %352 = vmatpush1.xpose.msra.mxu0 0.0
        %353 = vmatprep.subr.mxu0 0.0
        %354 = vmatpush1.xpose.msra.mxu0 0.0
        %355 = vmatprep.subr.mxu0 0.0
        %356 = vmatpush1.xpose.msra.mxu0 0.0
        %357 = vmatprep.subr.mxu0 0.0
        %358 = vmatpush1.xpose.msra.mxu0 0.0
        %359 = vmatprep.subr.mxu0 0.0
        %360 = vmatpush1.xpose.msra.mxu0 0.0
        %361 = vmatprep.subr.mxu0 0.0
        %362 = vmatpush1.xpose.msra.mxu0 0.0
        %363 = vmatprep.subr.mxu0 0.0
        %364 = vmatpush1.xpose.msra.mxu0 0.0
        %365 = vmatprep.subr.mxu0 0.0
        %366 = vmatpush1.xpose.msra.mxu0 0.0
        %367 = vmatprep.subr.mxu0 0.0
        %368 = vmatpush1.xpose.msra.mxu0 0.0
        %369 = vmatprep.subr.mxu0 0.0
        %370 = vmatpush1.xpose.msra.mxu0 0.0
        %371 = vmatprep.subr.mxu0 0.0
        %372 = vmatpush1.xpose.msra.mxu0 0.0
        %373 = vmatprep.mubr.f32.mxu0 0.0
        %374 = vmatmul.mubr.f32.gmra.mrb[0].mxu0 %v295
        %v375 = vpop.f32.mrb[0].mxu0
        %v376 = vadd.f32 0.0, %v375
        %v377 = vpop.f32.mrb[0].mxu0
        %378 = vdwg.mxu0
        %v379 = vmul.f32 %v376, 0.17677669
        %v380 = vld [vmem:[%s3] sm:$0xff]
        %v381 = vld [vmem:[%s3 + $0x8] sm:$0xff]
        %v382 = vld [vmem:[%s3 + $0x10] sm:$0xff]
        %v383 = vld [vmem:[%s3 + $0x18] sm:$0xff]
        %v385 = vsel %vm293, %v379, 0
        %387 = vmatprep.subr.mxu0 0.0
        %388 = vmatpush1.msra.mxu0 %v380
        %389 = vmatprep.subr.mxu0 0.0
        %390 = vmatpush1.msra.mxu0 %v381
        %391 = vmatprep.subr.mxu0 0.0
        %392 = vmatpush1.msra.mxu0 %v382
        %393 = vmatprep.subr.mxu0 0.0
        %394 = vmatpush1.msra.mxu0 %v383
        %395 = vmatprep.subr.mxu0 0.0
        %396 = vmatpush1.msra.mxu0 0.0
        %397 = vmatprep.subr.mxu0 0.0
        %398 = vmatpush1.msra.mxu0 0.0
        %399 = vmatprep.subr.mxu0 0.0
        %400 = vmatpush1.msra.mxu0 0.0
        %401 = vmatprep.subr.mxu0 0.0
        %402 = vmatpush1.msra.mxu0 0.0
        %403 = vmatprep.subr.mxu0 0.0
        %404 = vmatpush1.msra.mxu0 0.0
        %405 = vmatprep.subr.mxu0 0.0
        %406 = vmatpush1.msra.mxu0 0.0
        %407 = vmatprep.subr.mxu0 0.0
        %408 = vmatpush1.msra.mxu0 0.0
        %409 = vmatprep.subr.mxu0 0.0
        %410 = vmatpush1.msra.mxu0 0.0
        %411 = vmatprep.subr.mxu0 0.0
        %412 = vmatpush1.msra.mxu0 0.0
        %413 = vmatprep.subr.mxu0 0.0
        %414 = vmatpush1.msra.mxu0 0.0
        %415 = vmatprep.subr.mxu0 0.0
        %416 = vmatpush1.msra.mxu0 0.0
        %417 = vmatprep.subr.mxu0 0.0
        %418 = vmatpush1.msra.mxu0 0.0
        %419 = vmatprep.subr.mxu0 0.0
        %420 = vmatpush1.msra.mxu0 0.0
        %421 = vmatprep.subr.mxu0 0.0
        %422 = vmatpush1.msra.mxu0 0.0
        %423 = vmatprep.subr.mxu0 0.0
        %424 = vmatpush1.msra.mxu0 0.0
        %425 = vmatprep.subr.mxu0 0.0
        %426 = vmatpush1.msra.mxu0 0.0
        %427 = vmatprep.subr.mxu0 0.0
        %428 = vmatpush1.msra.mxu0 0.0
        %429 = vmatprep.subr.mxu0 0.0
        %430 = vmatpush1.msra.mxu0 0.0
        %431 = vmatprep.subr.mxu0 0.0
        %432 = vmatpush1.msra.mxu0 0.0
        %433 = vmatprep.subr.mxu0 0.0
        %434 = vmatpush1.msra.mxu0 0.0
        %435 = vmatprep.subr.mxu0 0.0
        %436 = vmatpush1.msra.mxu0 0.0
        %437 = vmatprep.subr.mxu0 0.0
        %438 = vmatpush1.msra.mxu0 0.0
        %439 = vmatprep.subr.mxu0 0.0
        %440 = vmatpush1.msra.mxu0 0.0
        %441 = vmatprep.subr.mxu0 0.0
        %442 = vmatpush1.msra.mxu0 0.0
        %443 = vmatprep.subr.mxu0 0.0
        %444 = vmatpush1.msra.mxu0 0.0
        %445 = vmatprep.subr.mxu0 0.0
        %446 = vmatpush1.msra.mxu0 0.0
        %447 = vmatprep.subr.mxu0 0.0
        %448 = vmatpush1.msra.mxu0 0.0
        %449 = vmatprep.subr.mxu0 0.0
        %450 = vmatpush1.msra.mxu0 0.0
        %451 = vmatprep.mubr.f32.mxu0 0.0
        %452 = vmatmul.mubr.f32.gmra.mrb[0].mxu0 %v385
        %v453 = vpop.f32.mrb[0].mxu0
        %v454 = vadd.f32 0.0, %v453
        %v455 = vpop.f32.mrb[0].mxu0
        %456 = vdwg.mxu0
        %v458 = vcombine.high %v454, %v454
        %v460 = vunpack.c.l.s4 1966171168
        %v461 = vunpack.c.0.s8 %v460
        %v462 = vlaneseq
        %v463 = vshrl.u32 %v462, 7
        %v464 = vsub.s32 %v461, %v463
        %v465 = vrot.slane %v454, %v464
        %v467 = vunpack.c.l.s4 1966171168
        %v468 = vunpack.c.0.s8 %v467
        %v469 = vlaneseq
        %v470 = vshrl.u32 %v469, 7
        %v471 = vsub.s32 %v468, %v470
        %v472 = vrot.slane %v458, %v471
        %v473 = vcombine.high %v465, %v465
        %v474 = vcombine.high %v472, %v472
        %v476 = vunpack.c.l.s4 1966171168
        %v477 = vunpack.c.0.s8 %v476
        %v478 = vlaneseq
        %v479 = vshrl.u32 %v478, 7
        %v480 = vsub.s32 %v477, %v479
        %v481 = vrot.slane %v465, %v480
        %v483 = vunpack.c.l.s4 1966171168
        %v484 = vunpack.c.0.s8 %v483
        %v485 = vlaneseq
        %v486 = vshrl.u32 %v485, 7
        %v487 = vsub.s32 %v484, %v486
        %v488 = vrot.slane %v472, %v487
        %v490 = vunpack.c.l.s4 1966171168
        %v491 = vunpack.c.0.s8 %v490
        %v492 = vlaneseq
        %v493 = vshrl.u32 %v492, 7
        %v494 = vsub.s32 %v491, %v493
        %v495 = vrot.slane %v473, %v494
        %v497 = vunpack.c.l.s4 1966171168
        %v498 = vunpack.c.0.s8 %v497
        %v499 = vlaneseq
        %v500 = vshrl.u32 %v499, 7
        %v501 = vsub.s32 %v498, %v500
        %v502 = vrot.slane %v474, %v501
        %v503 = vcombine.high %v481, %v481
        %v504 = vcombine.high %v488, %v488
        %v505 = vcombine.high %v495, %v495
        %v506 = vcombine.high %v502, %v502
        %v507 = vlaneseq
        %v508 = vshrl.u32 %v507, 7
        %v509 = vsub.s32 0, %v508
        %v510 = vrot.slane %v481, %v509
        %v511 = vlaneseq
        %v512 = vshrl.u32 %v511, 7
        %v513 = vsub.s32 0, %v512
        %v514 = vrot.slane %v495, %v513
        %v515 = vlaneseq
        %v516 = vshrl.u32 %v515, 7
        %v517 = vsub.s32 0, %v516
        %v518 = vrot.slane %v503, %v517
        %v519 = vlaneseq
        %v520 = vshrl.u32 %v519, 7
        %v521 = vsub.s32 0, %v520
        %v522 = vrot.slane %v505, %v521
        %v523 = vlaneseq
        %v524 = vshrl.u32 %v523, 7
        %v525 = vsub.s32 0, %v524
        %v526 = vrot.slane %v488, %v525
        %v527 = vlaneseq
        %v528 = vshrl.u32 %v527, 7
        %v529 = vsub.s32 0, %v528
        %v530 = vrot.slane %v502, %v529
        %v531 = vlaneseq
        %v532 = vshrl.u32 %v531, 7
        %v533 = vsub.s32 0, %v532
        %v534 = vrot.slane %v504, %v533
        %v535 = vlaneseq
        %v536 = vshrl.u32 %v535, 7
        %v537 = vsub.s32 0, %v536
        %v538 = vrot.slane %v506, %v537
        %v547 = vmul.f32 %v510, %v281
        %v548 = vmul.f32 %v514, %v282
        %v549 = vmul.f32 %v518, %v283
        %v550 = vmul.f32 %v522, %v284
        %v551 = vmul.f32 %v526, %v285
        %v552 = vmul.f32 %v530, %v286
        %v553 = vmul.f32 %v534, %v287
        %v554 = vmul.f32 %v538, %v288
        %vm555 = vcmask 259072
        %v556 = vsel %vm555, %v547, 0.0
        %557 = vadd.xlane.f32.xlu0 %v556
        %v558 = vpop.xlane.xlu0 %557
        %v559 = vsel %vm555, %v548, 0.0
        %560 = vadd.xlane.f32.xlu0 %v559
        %v561 = vpop.xlane.xlu0 %560
        %v562 = vsel %vm555, %v549, 0.0
        %563 = vadd.xlane.f32.xlu0 %v562
        %v564 = vpop.xlane.xlu0 %563
        %v565 = vsel %vm555, %v550, 0.0
        %566 = vadd.xlane.f32.xlu0 %v565
        %v567 = vpop.xlane.xlu0 %566
        %v568 = vsel %vm555, %v551, 0.0
        %569 = vadd.xlane.f32.xlu0 %v568
        %v570 = vpop.xlane.xlu0 %569
        %v571 = vsel %vm555, %v552, 0.0
        %572 = vadd.xlane.f32.xlu0 %v571
        %v573 = vpop.xlane.xlu0 %572
        %v574 = vsel %vm555, %v553, 0.0
        %575 = vadd.xlane.f32.xlu0 %v574
        %v576 = vpop.xlane.xlu0 %575
        %v577 = vsel %vm555, %v554, 0.0
        %578 = vadd.xlane.f32.xlu0 %v577
        %v579 = vpop.xlane.xlu0 %578
        %v588 = vlaneseq
        %v589 = vand.u32 %v588, 127
        %v590 = vlaneseq
        %v591 = vshrl.u32 %v590, 7
        %v592 = vsub.s32 %v589, %v591
        %v593 = vrot.slane %v558, %v592
        %v594 = vlaneseq
        %v595 = vshrl.u32 %v594, 7
        %v596 = vsub.s32 %v589, %v595
        %v597 = vrot.slane %v561, %v596
        %v598 = vlaneseq
        %v599 = vshrl.u32 %v598, 7
        %v600 = vsub.s32 %v589, %v599
        %v601 = vrot.slane %v564, %v600
        %v602 = vlaneseq
        %v603 = vshrl.u32 %v602, 7
        %v604 = vsub.s32 %v589, %v603
        %v605 = vrot.slane %v567, %v604
        %v606 = vlaneseq
        %v607 = vshrl.u32 %v606, 7
        %v608 = vsub.s32 %v589, %v607
        %v609 = vrot.slane %v570, %v608
        %v610 = vlaneseq
        %v611 = vshrl.u32 %v610, 7
        %v612 = vsub.s32 %v589, %v611
        %v613 = vrot.slane %v573, %v612
        %v614 = vlaneseq
        %v615 = vshrl.u32 %v614, 7
        %v616 = vsub.s32 %v589, %v615
        %v617 = vrot.slane %v576, %v616
        %v618 = vlaneseq
        %v619 = vshrl.u32 %v618, 7
        %v620 = vsub.s32 %v589, %v619
        %v621 = vrot.slane %v579, %v620
        %vm622 = vcmask 1041409
        %v623 = vsel %vm622, %v597, %v593
        %vm624 = vcmask 1042434
        %v625 = vsel %vm624, %v601, %v623
        %vm626 = vcmask 1043459
        %v627 = vsel %vm626, %v605, %v625
        %vm628 = vcmask 1044484
        %v629 = vsel %vm628, %v609, %v627
        %vm630 = vcmask 1045509
        %v631 = vsel %vm630, %v613, %v629
        %vm632 = vcmask 1046534
        %v633 = vsel %vm632, %v617, %v631
        %vm634 = vcmask 1047559
        %v635 = vsel %vm634, %v621, %v633
        %vm637 = vcmask 48128
        %v638 = vsel %vm637, %v635, -inf
        %639 = vmax.xlane.f32.xlu0 %v638
        %v640 = vpop.xlane.xlu0 %639
        %v642 = vlaneseq
        %v643 = vshrl.u32 %v642, 7
        %v644 = vsub.s32 0, %v643
        %v645 = vrot.slane %v640, %v644
        %v646 = vlaneseq
        %v647 = vshrl.u32 %v646, 7
        %v648 = vsub.s32 1, %v647
        %v649 = vrot.slane %v640, %v648
        %v650 = vlaneseq
        %v651 = vshrl.u32 %v650, 7
        %v652 = vsub.s32 2, %v651
        %v653 = vrot.slane %v640, %v652
        %v654 = vlaneseq
        %v655 = vshrl.u32 %v654, 7
        %v656 = vsub.s32 3, %v655
        %v657 = vrot.slane %v640, %v656
        %v658 = vlaneseq
        %v659 = vshrl.u32 %v658, 7
        %v660 = vsub.s32 4, %v659
        %v661 = vrot.slane %v640, %v660
        %v662 = vlaneseq
        %v663 = vshrl.u32 %v662, 7
        %v664 = vsub.s32 5, %v663
        %v665 = vrot.slane %v640, %v664
        %v666 = vlaneseq
        %v667 = vshrl.u32 %v666, 7
        %v668 = vsub.s32 6, %v667
        %v669 = vrot.slane %v640, %v668
        %v670 = vlaneseq
        %v671 = vshrl.u32 %v670, 7
        %v672 = vsub.s32 7, %v671
        %v673 = vrot.slane %v640, %v672
        %v682 = vsub.f32 %v558, %v645
        %v683 = vsub.f32 %v561, %v649
        %v684 = vsub.f32 %v564, %v653
        %v685 = vsub.f32 %v567, %v657
        %v686 = vsub.f32 %v570, %v661
        %v687 = vsub.f32 %v573, %v665
        %v688 = vsub.f32 %v576, %v669
        %v689 = vsub.f32 %v579, %v673
        %v690 = vmul.f32 %v682, 1.442695
        %v691 = vpow.pop %v690
        %v692 = vmul.f32 %v683, 1.442695
        %v693 = vpow.pop %v692
        %v694 = vmul.f32 %v684, 1.442695
        %v695 = vpow.pop %v694
        %v696 = vmul.f32 %v685, 1.442695
        %v697 = vpow.pop %v696
        %v698 = vmul.f32 %v686, 1.442695
        %v699 = vpow.pop %v698
        %v700 = vmul.f32 %v687, 1.442695
        %v701 = vpow.pop %v700
        %v702 = vmul.f32 %v688, 1.442695
        %v703 = vpow.pop %v702
        %v704 = vmul.f32 %v689, 1.442695
        %v705 = vpow.pop %v704
        %714 = vset.pattern.permute.xlu0 0
        %715 = vperm.xlu0 %714, %v691
        %v716 = vpop.permute.xlu0 %715
        %717 = vset.pattern.permute.xlu0 0
        %718 = vperm.xlu0 %717, %v693
        %v719 = vpop.permute.xlu0 %718
        %720 = vset.pattern.permute.xlu0 0
        %721 = vperm.xlu0 %720, %v695
        %v722 = vpop.permute.xlu0 %721
        %723 = vset.pattern.permute.xlu0 0
        %724 = vperm.xlu0 %723, %v697
        %v725 = vpop.permute.xlu0 %724
        %726 = vset.pattern.permute.xlu0 0
        %727 = vperm.xlu0 %726, %v699
        %v728 = vpop.permute.xlu0 %727
        %729 = vset.pattern.permute.xlu0 0
        %730 = vperm.xlu0 %729, %v701
        %v731 = vpop.permute.xlu0 %730
        %732 = vset.pattern.permute.xlu0 0
        %733 = vperm.xlu0 %732, %v703
        %v734 = vpop.permute.xlu0 %733
        %735 = vset.pattern.permute.xlu0 0
        %736 = vperm.xlu0 %735, %v705
        %v737 = vpop.permute.xlu0 %736
        %v738 = vlaneseq
        %v739 = vshrl.u32 %v738, 7
        %v740 = vsub.s32 %v589, %v739
        %v741 = vrot.slane %v716, %v740
        %v742 = vlaneseq
        %v743 = vshrl.u32 %v742, 7
        %v744 = vsub.s32 %v589, %v743
        %v745 = vrot.slane %v719, %v744
        %v746 = vlaneseq
        %v747 = vshrl.u32 %v746, 7
        %v748 = vsub.s32 %v589, %v747
        %v749 = vrot.slane %v722, %v748
        %v750 = vlaneseq
        %v751 = vshrl.u32 %v750, 7
        %v752 = vsub.s32 %v589, %v751
        %v753 = vrot.slane %v725, %v752
        %v754 = vlaneseq
        %v755 = vshrl.u32 %v754, 7
        %v756 = vsub.s32 %v589, %v755
        %v757 = vrot.slane %v728, %v756
        %v758 = vlaneseq
        %v759 = vshrl.u32 %v758, 7
        %v760 = vsub.s32 %v589, %v759
        %v761 = vrot.slane %v731, %v760
        %v762 = vlaneseq
        %v763 = vshrl.u32 %v762, 7
        %v764 = vsub.s32 %v589, %v763
        %v765 = vrot.slane %v734, %v764
        %v766 = vlaneseq
        %v767 = vshrl.u32 %v766, 7
        %v768 = vsub.s32 %v589, %v767
        %v769 = vrot.slane %v737, %v768
        %v770 = vsel %vm622, %v745, %v741
        %v771 = vsel %vm624, %v749, %v770
        %v772 = vsel %vm626, %v753, %v771
        %v773 = vsel %vm628, %v757, %v772
        %v774 = vsel %vm630, %v761, %v773
        %v775 = vsel %vm632, %v765, %v774
        %v776 = vsel %vm634, %v769, %v775
        %v778 = vsel %vm637, %v776, 0.0
        %779 = vadd.xlane.f32.xlu0 %v778
        %v780 = vpop.xlane.xlu0 %779
        %v782 = vlaneseq
        %v783 = vshrl.u32 %v782, 7
        %v784 = vsub.s32 0, %v783
        %v785 = vrot.slane %v780, %v784
        %v786 = vlaneseq
        %v787 = vshrl.u32 %v786, 7
        %v788 = vsub.s32 1, %v787
        %v789 = vrot.slane %v780, %v788
        %v790 = vlaneseq
        %v791 = vshrl.u32 %v790, 7
        %v792 = vsub.s32 2, %v791
        %v793 = vrot.slane %v780, %v792
        %v794 = vlaneseq
        %v795 = vshrl.u32 %v794, 7
        %v796 = vsub.s32 3, %v795
        %v797 = vrot.slane %v780, %v796
        %v798 = vlaneseq
        %v799 = vshrl.u32 %v798, 7
        %v800 = vsub.s32 4, %v799
        %v801 = vrot.slane %v780, %v800
        %v802 = vlaneseq
        %v803 = vshrl.u32 %v802, 7
        %v804 = vsub.s32 5, %v803
        %v805 = vrot.slane %v780, %v804
        %v806 = vlaneseq
        %v807 = vshrl.u32 %v806, 7
        %v808 = vsub.s32 6, %v807
        %v809 = vrot.slane %v780, %v808
        %v810 = vlaneseq
        %v811 = vshrl.u32 %v810, 7
        %v812 = vsub.s32 7, %v811
        %v813 = vrot.slane %v780, %v812
        %v822 = vrcp.pop %v785
        %v823 = vmul.f32 %v691, %v822
        %v824 = vrcp.pop %v789
        %v825 = vmul.f32 %v693, %v824
        %v826 = vrcp.pop %v793
        %v827 = vmul.f32 %v695, %v826
        %v828 = vrcp.pop %v797
        %v829 = vmul.f32 %v697, %v828
        %v830 = vrcp.pop %v801
        %v831 = vmul.f32 %v699, %v830
        %v832 = vrcp.pop %v805
        %v833 = vmul.f32 %v701, %v832
        %v834 = vrcp.pop %v809
        %v835 = vmul.f32 %v703, %v834
        %v836 = vrcp.pop %v813
        %v837 = vmul.f32 %v705, %v836
        %839 = vset.pattern.permute.xlu0 0
        %840 = vperm.xlu0 %839, %v823
        %v841 = vpop.permute.xlu0 %840
        %844 = vset.pattern.permute.xlu0 0
        %845 = vperm.xlu0 %844, %v825
        %v846 = vpop.permute.xlu0 %845
        %849 = vset.pattern.permute.xlu0 0
        %850 = vperm.xlu0 %849, %v827
        %v851 = vpop.permute.xlu0 %850
        %854 = vset.pattern.permute.xlu0 0
        %855 = vperm.xlu0 %854, %v829
        %v856 = vpop.permute.xlu0 %855
        %859 = vset.pattern.permute.xlu0 0
        %860 = vperm.xlu0 %859, %v831
        %v861 = vpop.permute.xlu0 %860
        %864 = vset.pattern.permute.xlu0 0
        %865 = vperm.xlu0 %864, %v833
        %v866 = vpop.permute.xlu0 %865
        %869 = vset.pattern.permute.xlu0 0
        %870 = vperm.xlu0 %869, %v835
        %v871 = vpop.permute.xlu0 %870
        %874 = vset.pattern.permute.xlu0 0
        %875 = vperm.xlu0 %874, %v837
        %v876 = vpop.permute.xlu0 %875
        %v878 = vmul.f32 %v841, %v281
        %v879 = vmul.f32 %v846, %v282
        %v880 = vmul.f32 %v851, %v283
        %v881 = vmul.f32 %v856, %v284
        %v882 = vmul.f32 %v861, %v285
        %v883 = vmul.f32 %v866, %v286
        %v884 = vmul.f32 %v871, %v287
        %v885 = vmul.f32 %v876, %v288
        %v886 = vsel %vm555, %v878, 0.0
        %v887 = vrot.slane %v886, 4
        %v888 = vadd.f32 %v886, %v887
        %v889 = vrot.slane %v888, 2
        %v890 = vadd.f32 %v888, %v889
        %v891 = vrot.slane %v890, 1
        %v892 = vadd.f32 %v890, %v891
        %v893 = vsel %vm555, %v879, 0.0
        %v894 = vrot.slane %v893, 4
        %v895 = vadd.f32 %v893, %v894
        %v896 = vrot.slane %v895, 2
        %v897 = vadd.f32 %v895, %v896
        %v898 = vrot.slane %v897, 1
        %v899 = vadd.f32 %v897, %v898
        %v900 = vsel %vm555, %v880, 0.0
        %v901 = vrot.slane %v900, 4
        %v902 = vadd.f32 %v900, %v901
        %v903 = vrot.slane %v902, 2
        %v904 = vadd.f32 %v902, %v903
        %v905 = vrot.slane %v904, 1
        %v906 = vadd.f32 %v904, %v905
        %v907 = vsel %vm555, %v881, 0.0
        %v908 = vrot.slane %v907, 4
        %v909 = vadd.f32 %v907, %v908
        %v910 = vrot.slane %v909, 2
        %v911 = vadd.f32 %v909, %v910
        %v912 = vrot.slane %v911, 1
        %v913 = vadd.f32 %v911, %v912
        %v914 = vsel %vm555, %v882, 0.0
        %v915 = vrot.slane %v914, 4
        %v916 = vadd.f32 %v914, %v915
        %v917 = vrot.slane %v916, 2
        %v918 = vadd.f32 %v916, %v917
        %v919 = vrot.slane %v918, 1
        %v920 = vadd.f32 %v918, %v919
        %v921 = vsel %vm555, %v883, 0.0
        %v922 = vrot.slane %v921, 4
        %v923 = vadd.f32 %v921, %v922
        %v924 = vrot.slane %v923, 2
        %v925 = vadd.f32 %v923, %v924
        %v926 = vrot.slane %v925, 1
        %v927 = vadd.f32 %v925, %v926
        %v928 = vsel %vm555, %v884, 0.0
        %v929 = vrot.slane %v928, 4
        %v930 = vadd.f32 %v928, %v929
        %v931 = vrot.slane %v930, 2
        %v932 = vadd.f32 %v930, %v931
        %v933 = vrot.slane %v932, 1
        %v934 = vadd.f32 %v932, %v933
        %v935 = vsel %vm555, %v885, 0.0
        %v936 = vrot.slane %v935, 4
        %v937 = vadd.f32 %v935, %v936
        %v938 = vrot.slane %v937, 2
        %v939 = vadd.f32 %v937, %v938
        %v940 = vrot.slane %v939, 1
        %v941 = vadd.f32 %v939, %v940
        %v942 = vld [vmem:[%s4] sm:$0xff]
        %v943 = vld [vmem:[%s4 + $0x8] sm:$0xff]
        %v944 = vld [vmem:[%s4 + $0x10] sm:$0xff]
        %v945 = vld [vmem:[%s4 + $0x18] sm:$0xff]
        %v954 = vsel %vm622, %v899, %v892
        %v955 = vsel %vm624, %v906, %v954
        %v956 = vsel %vm626, %v913, %v955
        %v957 = vsel %vm628, %v920, %v956
        %v958 = vsel %vm630, %v927, %v957
        %v959 = vsel %vm632, %v934, %v958
        %v960 = vsel %vm634, %v941, %v959
        %v961 = vsel %vm293, %v960, 0
        %v964 = vsel %vm293, %v942, 0
        %v967 = vsel %vm293, %v943, 0
        %v970 = vsel %vm293, %v944, 0
        %v973 = vsel %vm293, %v945, 0
        %975 = vmatprep.subr.mxu0 0.0
        %976 = vmatpush1.xpose.msra.mxu0 %v964
        %977 = vmatprep.subr.mxu0 0.0
        %978 = vmatpush1.xpose.msra.mxu0 %v967
        %979 = vmatprep.subr.mxu0 0.0
        %980 = vmatpush1.xpose.msra.mxu0 %v970
        %981 = vmatprep.subr.mxu0 0.0
        %982 = vmatpush1.xpose.msra.mxu0 %v973
        %983 = vmatprep.subr.mxu0 0.0
        %984 = vmatpush1.xpose.msra.mxu0 0.0
        %985 = vmatprep.subr.mxu0 0.0
        %986 = vmatpush1.xpose.msra.mxu0 0.0
        %987 = vmatprep.subr.mxu0 0.0
        %988 = vmatpush1.xpose.msra.mxu0 0.0
        %989 = vmatprep.subr.mxu0 0.0
        %990 = vmatpush1.xpose.msra.mxu0 0.0
        %991 = vmatprep.subr.mxu0 0.0
        %992 = vmatpush1.xpose.msra.mxu0 0.0
        %993 = vmatprep.subr.mxu0 0.0
        %994 = vmatpush1.xpose.msra.mxu0 0.0
        %995 = vmatprep.subr.mxu0 0.0
        %996 = vmatpush1.xpose.msra.mxu0 0.0
        %997 = vmatprep.subr.mxu0 0.0
        %998 = vmatpush1.xpose.msra.mxu0 0.0
        %999 = vmatprep.subr.mxu0 0.0
        %1000 = vmatpush1.xpose.msra.mxu0 0.0
        %1001 = vmatprep.subr.mxu0 0.0
        %1002 = vmatpush1.xpose.msra.mxu0 0.0
        %1003 = vmatprep.subr.mxu0 0.0
        %1004 = vmatpush1.xpose.msra.mxu0 0.0
        %1005 = vmatprep.subr.mxu0 0.0
        %1006 = vmatpush1.xpose.msra.mxu0 0.0
        %1007 = vmatprep.subr.mxu0 0.0
        %1008 = vmatpush1.xpose.msra.mxu0 0.0
        %1009 = vmatprep.subr.mxu0 0.0
        %1010 = vmatpush1.xpose.msra.mxu0 0.0
        %1011 = vmatprep.subr.mxu0 0.0
        %1012 = vmatpush1.xpose.msra.mxu0 0.0
        %1013 = vmatprep.subr.mxu0 0.0
        %1014 = vmatpush1.xpose.msra.mxu0 0.0
        %1015 = vmatprep.subr.mxu0 0.0
        %1016 = vmatpush1.xpose.msra.mxu0 0.0
        %1017 = vmatprep.subr.mxu0 0.0
        %1018 = vmatpush1.xpose.msra.mxu0 0.0
        %1019 = vmatprep.subr.mxu0 0.0
        %1020 = vmatpush1.xpose.msra.mxu0 0.0
        %1021 = vmatprep.subr.mxu0 0.0
        %1022 = vmatpush1.xpose.msra.mxu0 0.0
        %1023 = vmatprep.subr.mxu0 0.0
        %1024 = vmatpush1.xpose.msra.mxu0 0.0
        %1025 = vmatprep.subr.mxu0 0.0
        %1026 = vmatpush1.xpose.msra.mxu0 0.0
        %1027 = vmatprep.subr.mxu0 0.0
        %1028 = vmatpush1.xpose.msra.mxu0 0.0
        %1029 = vmatprep.subr.mxu0 0.0
        %1030 = vmatpush1.xpose.msra.mxu0 0.0
        %1031 = vmatprep.subr.mxu0 0.0
        %1032 = vmatpush1.xpose.msra.mxu0 0.0
        %1033 = vmatprep.subr.mxu0 0.0
        %1034 = vmatpush1.xpose.msra.mxu0 0.0
        %1035 = vmatprep.subr.mxu0 0.0
        %1036 = vmatpush1.xpose.msra.mxu0 0.0
        %1037 = vmatprep.subr.mxu0 0.0
        %1038 = vmatpush1.xpose.msra.mxu0 0.0
        %1039 = vmatprep.mubr.f32.mxu0 0.0
        %1040 = vmatmul.mubr.f32.gmra.mrb[0].mxu0 %v961
        %v1041 = vpop.f32.mrb[0].mxu0
        %v1042 = vadd.f32 0.0, %v1041
        %v1043 = vpop.f32.mrb[0].mxu0
        %1044 = vdwg.mxu0
        %v1045 = vmul.f32 %v1042, 6.0
        %s1046 = smul.u32 %s24, 8
        %v1047 = vlaneseq
        %v1048 = vshrl.u32 %v1047, 7
        %v1049 = vstv %s1046
        %v1050 = vadd.s32 %v1049, %v1048
        %vm1051 = vcmp.lt.s32.totalorder %v1050, 20
        %v1052 = vsel %vm1051, 1, 0
        %v1053 = vcvt.s32.f32 %v1052
        %v1054 = vmul.f32 %v1045, %v1053
        %v1055 = vmul.f32 %v280, %v1053
        %v1056 = vmul.f32 %v1054, %v1055
        %1057 = vst.msk [vmem:[%s262] sm:$0xff] %vm293, %v1056
        %1059 = vrot.lane.b32.xlu0 %v1054, 32
        %v1060 = vpop.permute.xlu0 %1059
        %vm1062 = vcmask 523520
        %1063 = vst.msk [vmem:[%s262] sm:$0xff] %vm1062, %v1060
        %1065 = vrot.lane.b32.xlu0 %v1055, 64
        %v1066 = vpop.permute.xlu0 %1065
        %vm1068 = vcmask 785920
        %1069 = vst.msk [vmem:[%s262] sm:$0xff] %vm1068, %v1066
        %vm1070 = vcmask 1048320
        %1071 = vst.msk [vmem:[%s262] sm:$0xff] %vm1070, 0.0
        %v1072 = vld [vmem:[%s262] sm:$0xff]
        %v1073 = vrot.slane %v1072, 4
        %v1074 = vadd.f32 %v1072, %v1073
        %v1075 = vrot.slane %v1074, 2
        %v1076 = vadd.f32 %v1074, %v1075
        %v1077 = vrot.slane %v1076, 1
        %v1078 = vadd.f32 %v1076, %v1077
        %1079 = vst [vmem:[%s269] sm:$0x1] %v1078
        %v1080 = vmul.f32 %v1072, %v1072
        %v1081 = vrot.slane %v1080, 4
        %v1082 = vadd.f32 %v1080, %v1081
        %v1083 = vrot.slane %v1082, 2
        %v1084 = vadd.f32 %v1082, %v1083
        %v1085 = vrot.slane %v1084, 1
        %v1086 = vadd.f32 %v1084, %v1085
        %1087 = vst [vmem:[%s269 + $0x1] sm:$0x1] %v1086
        %s1088 = sand.u32 %s147, 1
        %s1089 = scalar_lea.sflag [#allocation3], %s1088
        %s1090 = sand.u32 %s147, 1
        %s1091 = smul.addr %s1090, 8
        %s1092 = scalar_lea.vmem [#allocation2], %s1091
        %s1093 = sand.u32 %s173, 1
        %s1094 = scalar_lea.sflag [#allocation5], %s1093
        %s1095 = sand.u32 %s173, 1
        %s1096 = smul.addr %s1095, 2
        %s1097 = scalar_lea.vmem [#allocation4], %s1096
        // Predicated region
        $region41: #{tpu_custom_call.1} parent=39 // pred_check
          %p1098 = pneg %p157
        $region42: #{tpu_custom_call.1} parent=39 // pred_check_branch
          %1100 = sbr.rel (%p1098) target = $region44
        $region43: #{tpu_custom_call.1} parent=39 // pred_region
          %s1102 = ssub.s32 128, 128
          %1103 = vsyncadd %s1089, %s1102
          %s1104 = smul.addr %s24, 128
          %s1105 = scalar_lea.hbm %s5, %s1104
          %s1107 = sshll.u32 %s1092, 4
          %s1108 = int_to_ptr.vmem [resolvable:$true] %s1107
          %1110 = dma.vmem_to_hbm [thread:$0]  %s1108, 128, %s1105, %s1089
        $region44: #{tpu_custom_call.1} parent=39 // pred_fallthru
          _
        // Predicated region
        $region45: #{tpu_custom_call.1} parent=39 // pred_check
          %p1111 = pneg %p183
        $region46: #{tpu_custom_call.1} parent=39 // pred_check_branch
          %1113 = sbr.rel (%p1111) target = $region48
        $region47: #{tpu_custom_call.1} parent=39 // pred_region
          %s1115 = ssub.s32 32, 32
          %1116 = vsyncadd %s1094, %s1115
          %s1117 = smul.addr %s24, 32
          %s1118 = scalar_lea.hbm %s6, %s1117
          %s1120 = sshll.u32 %s1097, 4
          %s1121 = int_to_ptr.vmem [resolvable:$true] %s1120
          %1123 = dma.vmem_to_hbm [thread:$0]  %s1121, 32, %s1118, %s1094
        $region48: #{tpu_custom_call.1} parent=39 // pred_fallthru
          _
      $region40: #{tpu_custom_call.1} parent=5 // pred_fallthru
        _
      %p1124 = scmp.le.s32.totalorder 2, %s19
      // Predicated region
      $region49: #{tpu_custom_call.1} parent=5 // pred_check
        %p1125 = pneg %p1124
      $region50: #{tpu_custom_call.1} parent=5 // pred_check_branch
        %1127 = sbr.rel (%p1125) target = $region52
      $region51: #{tpu_custom_call.1} parent=5 // pred_region
        %s1128 = ssub.s32 %s19, 2
        // Predicated region
        $region53: #{tpu_custom_call.1} parent=51 // pred_check
          %p1129 = pneg %p163
        $region54: #{tpu_custom_call.1} parent=51 // pred_check_branch
          %1131 = sbr.rel (%p1129) target = $region56
        $region55: #{tpu_custom_call.1} parent=51 // pred_region
          %s1132 = sand.u32 %s148, 1
          %s1133 = scalar_lea.sflag [#allocation3], %s1132
          %s1134 = sand.u32 %s148, 1
          %s1135 = smul.addr %s1134, 8
          %s1136 = scalar_lea.vmem [#allocation2], %s1135
          %1137 = dma.done %s1133, 128
        $region56: #{tpu_custom_call.1} parent=51 // pred_fallthru
          _
        // Predicated region
        $region57: #{tpu_custom_call.1} parent=51 // pred_check
          %p1138 = pneg %p189
        $region58: #{tpu_custom_call.1} parent=51 // pred_check_branch
          %1140 = sbr.rel (%p1138) target = $region60
        $region59: #{tpu_custom_call.1} parent=51 // pred_region
          %s1141 = sand.u32 %s174, 1
          %s1142 = scalar_lea.sflag [#allocation5], %s1141
          %s1143 = sand.u32 %s174, 1
          %s1144 = smul.addr %s1143, 2
          %s1145 = scalar_lea.vmem [#allocation4], %s1144
          %1146 = dma.done %s1142, 32
        $region60: #{tpu_custom_call.1} parent=51 // pred_fallthru
          _
      $region52: #{tpu_custom_call.1} parent=5 // pred_fallthru
        _
    $region6: #{tpu_custom_call.1} parent=1 // loop_footer
      %s23 = sadd.s32 1, %s19
    $region7: #{tpu_custom_call.1} parent=1 // loop_footer_branch
      %18 = sbr.rel target = $region3
    $region8: #{tpu_custom_call.1} parent=1 // loop_exit
      _
    %1147 = vsyncpa [#allocation3], 1
    %s1148 = scalar_lea.sflag [#allocation3], 1
    %1149 = vsyncpa %s1148, 1
    %1150 = vsyncpa [#allocation5], 1
    %s1151 = scalar_lea.sflag [#allocation5], 1
    %1152 = vsyncpa %s1151, 1

</llo_original>
